<compile_context>
chip_gen: v6e
topology: v6e:2x2x1
jax: 0.10.0
libtpu: 0.0.40
codegen_flags: <defaults>
</compile_context>

<pallas_src>
import functools

import jax
import jax.numpy as jnp
from jax.experimental import pallas as pl
from jax.experimental.pallas import tpu as pltpu


def _round_up(x, m):
    return (x + m - 1) // m * m


# ----------------------------------------------------------------------------
# Pallas kernel: fused 1x1 conv (matmul) + BN(eval) + PReLU
# ----------------------------------------------------------------------------
def _conv1x1_bn_prelu_kernel(x_ref, w_ref, sc_ref, sh_ref, al_ref, o_ref):
    """o = PReLU( (W @ x) * scale + shift ).

    x_ref : (Cin, TN)  activation slab (one image: channels x pixels)
    w_ref : (TM, Cin)  bf16 weights
    sc/sh/al : (TM, 1) per-output-channel BN scale / shift / PReLU alpha (f32)
    o_ref : (TM, TN)   f32 output slab
    """
    x = x_ref[...].astype(jnp.bfloat16)          # bf16 operands for the MXU
    w = w_ref[...]                               # already bf16
    acc = jnp.dot(w, x, preferred_element_type=jnp.float32)   # (TM, TN) f32
    y = acc * sc_ref[...] + sh_ref[...]          # folded BatchNorm (eval)
    y = jnp.where(y >= 0.0, y, y * al_ref[...])  # PReLU (per channel alpha)
    o_ref[...] = y.astype(o_ref.dtype)


@functools.lru_cache(maxsize=None)
def _get_adjust_fn(B, K, Mp, Np, TM, TN, x_dtype_name):
    """Build & cache the pallas_call for a given padded problem shape."""
    grid = (B, Mp // TM, Np // TN)

    in_specs = [
        # activations: (B, Cin, HWp); batch axis squeezed out of the kernel
        pl.BlockSpec((None, K, TN), lambda b, i, j: (b, 0, j)),
        # weights (Cout_p, Cin) in bf16
        pl.BlockSpec((TM, K), lambda b, i, j: (i, 0)),
        # per-channel BN scale / shift / PReLU alpha as (Cout_p, 1) columns
        pl.BlockSpec((TM, 1), lambda b, i, j: (i, 0)),
        pl.BlockSpec((TM, 1), lambda b, i, j: (i, 0)),
        pl.BlockSpec((TM, 1), lambda b, i, j: (i, 0)),
    ]
    out_spec = pl.BlockSpec((None, TM, TN), lambda b, i, j: (b, i, j))

    # VMEM budget: double-buffered inputs + output (+ headroom), capped for v7x.
    x_bpe = jnp.dtype(x_dtype_name).itemsize
    vmem_est = 2 * (K * TN * x_bpe          # activation tile
                    + TM * K * 2            # bf16 weight tile
                    + 3 * TM * 4            # scale/shift/alpha columns
                    + TM * TN * 4)          # f32 output tile
    vmem_limit = int(min(48 * 2 ** 20, max(4 * vmem_est, 32 * 2 ** 20)))

    fn = pl.pallas_call(
        _conv1x1_bn_prelu_kernel,
        out_shape=jax.ShapeDtypeStruct((B, Mp, Np), jnp.float32),
        grid_spec=pltpu.PrefetchScalarGridSpec(
            num_scalar_prefetch=0,
            grid=grid,
            in_specs=in_specs,
            out_specs=out_spec),
        compiler_params=pltpu.CompilerParams(
            dimension_semantics=("parallel", "parallel", "parallel"),
            vmem_limit_bytes=vmem_limit),
    )
    return jax.jit(fn)


# ----------------------------------------------------------------------------
# module wrapper
# ----------------------------------------------------------------------------
def adjustment_apply(params, x):
    """Adjustment forward: 1x1 conv (no bias) + BatchNorm(eval) + PReLU.

    x: (B, Cin, H, W) NCHW float array.  Returns (B, Cout, H, W) float32.
    """
    w = params['w']                     # (Cout, Cin) bf16
    scale = params['scale']             # (Cout, 1) f32
    shift = params['shift']             # (Cout, 1) f32
    alpha = params['alpha']             # (Cout, 1) f32

    B, Cin, H, W = x.shape
    Cout = w.shape[0]
    N = H * W
    x_r = x.reshape(B, Cin, N)          # free reshape, NCHW preserved

    # --- pad lane dim (H*W) to a multiple of 128 only if needed -------------
    Np = _round_up(N, 128)
    if Np != N:
        x_r = jnp.pad(x_r, ((0, 0), (0, 0), (0, Np - N)))

    # --- pad / tile the output-channel dim -----------------------------------
    Mp = _round_up(Cout, 8)
    if Mp <= 512:
        TM = Mp
    else:
        Mp = _round_up(Mp, 256)
        TM = 256
    if Mp != Cout:
        w = jnp.pad(w, ((0, Mp - Cout), (0, 0)))
        scale = jnp.pad(scale, ((0, Mp - Cout), (0, 0)), constant_values=1.0)
        shift = jnp.pad(shift, ((0, Mp - Cout), (0, 0)))
        alpha = jnp.pad(alpha, ((0, Mp - Cout), (0, 0)), constant_values=1.0)

    # --- lane tile: as big as divides Np (512 -> 256 -> 128) ----------------
    for cand in (512, 256, 128):
        if Np % cand == 0:
            TN = cand
            break

    fn = _get_adjust_fn(B, Cin, Mp, Np, TM, TN, jnp.dtype(x.dtype).name)
    out = fn(x_r, w, scale, shift, alpha)        # (B, Mp, Np) f32
    out = out[:, :Cout, :N]
    return out.reshape(B, Cout, H, W)


# ----------------------------------------------------------------------------
# deterministic parameter construction (BN eval-mode stats folded)
# ----------------------------------------------------------------------------
def make_adjustment_params(key, cin, cout, eps=1e-5):
    ks = jax.random.split(key, 5)
    w = jax.random.normal(ks[0], (cout, cin), jnp.float32) * (1.0 / cin) ** 0.5
    gamma = 1.0 + 0.1 * jax.random.normal(ks[1], (cout,), jnp.float32)
    beta = 0.1 * jax.random.normal(ks[2], (cout,), jnp.float32)
    mean = 0.05 * jax.random.normal(ks[3], (cout,), jnp.float32)
    var = jnp.abs(1.0 + 0.1 * jax.random.normal(ks[4], (cout,), jnp.float32))
    # TODO(synk): training-mode BatchNorm (batch statistics) is not modeled;
    # eval-mode running stats are folded into a per-channel scale/shift.
    scale = gamma / jnp.sqrt(var + eps)
    shift = beta - mean * scale
    alpha = jnp.full((cout,), 0.25, jnp.float32)   # PyTorch PReLU default
    return dict(
        w=w.astype(jnp.bfloat16),
        scale=scale.reshape(cout, 1),
        shift=shift.reshape(cout, 1),
        alpha=alpha.reshape(cout, 1),
    )


# ----------------------------------------------------------------------------
# pure-JAX reference (matches the kernel's bf16 operand precision)
# ----------------------------------------------------------------------------
def adjustment_reference(params, x):
    w = params['w'].astype(jnp.float32)                       # bf16 -> f32 exact
    xb = x.astype(jnp.bfloat16).astype(jnp.float32)           # same rounding as kernel
    y = jnp.einsum('oc,bchw->bohw', w, xb)
    sc = params['scale'].reshape(1, -1, 1, 1)
    sh = params['shift'].reshape(1, -1, 1, 1)
    al = params['alpha'].reshape(1, -1, 1, 1)
    y = y * sc + sh
    return jnp.where(y >= 0.0, y, y * al)


# ----------------------------------------------------------------------------
# main
# ----------------------------------------------------------------------------
if __name__ == "__main__":
    root = jax.random.PRNGKey(0)
    kp1, kp2, kx1, kx2 = jax.random.split(root, 4)

    # Adjustment(64 -> 128) as used for adjust2 in SPFNet (H*W = 256, no padding)
    p1 = make_adjustment_params(kp1, 64, 128)
    x1 = jax.random.normal(kx1, (2, 64, 16, 16), jnp.float32)
    y1 = adjustment_apply(p1, x1)

    # Adjustment(256 -> 128) as used for adjust3 (H*W = 64 -> exercises lane padding)
    p2 = make_adjustment_params(kp2, 256, 128)
    x2 = jax.random.normal(kx2, (2, 256, 8, 8), jnp.float32)
    y2 = adjustment_apply(p2, x2)

    y1, y2 = jax.block_until_ready((y1, y2))

    assert y1.shape == (2, 128, 16, 16), y1.shape
    assert y2.shape == (2, 128, 8, 8), y2.shape
    assert bool(jnp.all(jnp.isfinite(y1)))
    assert bool(jnp.all(jnp.isfinite(y2)))

    r1 = adjustment_reference(p1, x1)
    r2 = adjustment_reference(p2, x2)
    assert bool(jnp.allclose(y1, r1, rtol=2e-2, atol=2e-2))
    assert bool(jnp.allclose(y2, r2, rtol=2e-2, atol=2e-2))

    print("KERNEL_OK")
</pallas_src>

<mosaic_0001>
module attributes {stable_mosaic.version = 11 : i64} {
  func.func @_conv1x1_bn_prelu_kernel(%arg0: i32, %arg1: i32, %arg2: i32, %arg3: memref<1x64x256xf32, #tpu.memory_space<vmem>>, %arg4: memref<128x64xbf16, #tpu.memory_space<vmem>>, %arg5: memref<128x1xf32, #tpu.memory_space<vmem>>, %arg6: memref<128x1xf32, #tpu.memory_space<vmem>>, %arg7: memref<128x1xf32, #tpu.memory_space<vmem>>, %arg8: memref<1x128x256xf32, #tpu.memory_space<vmem>>) attributes {dimension_semantics = [#tpu.dimension_semantics<parallel>, #tpu.dimension_semantics<parallel>, #tpu.dimension_semantics<parallel>], iteration_bounds = array<i64: 2, 1, 1>, scalar_prefetch = 0 : i64, scratch_operands = 0 : i64, tpu.core_type = #tpu.core_type<tc>, window_params = [{transform_indices = @transform_0, window_bounds = array<i64: 1, 64, 256>}, {transform_indices = @transform_1, window_bounds = array<i64: 128, 64>}, {transform_indices = @transform_2, window_bounds = array<i64: 128, 1>}, {transform_indices = @transform_3, window_bounds = array<i64: 128, 1>}, {transform_indices = @transform_4, window_bounds = array<i64: 128, 1>}, {transform_indices = @transform_5, window_bounds = array<i64: 1, 128, 256>}]} {
    %c0 = arith.constant 0 : index
    %c0_0 = arith.constant 0 : index
    %c0_1 = arith.constant 0 : index
    %0 = vector.load %arg3[%c0, %c0_0, %c0_1] : memref<1x64x256xf32, #tpu.memory_space<vmem>>, vector<1x64x256xf32>
    %1 = vector.shape_cast %0 : vector<1x64x256xf32> to vector<64x256xf32>
    %2 = arith.truncf %1 : vector<64x256xf32> to vector<64x256xbf16>
    %c0_2 = arith.constant 0 : index
    %c0_3 = arith.constant 0 : index
    %3 = vector.load %arg4[%c0_2, %c0_3] : memref<128x64xbf16, #tpu.memory_space<vmem>>, vector<128x64xbf16>
    %cst = arith.constant dense<0.000000e+00> : vector<128x256xf32>
    %4 = tpu.matmul %3, %2, %cst {dimension_numbers = #tpu.dot_dimension_numbers<[1], [0], [0], [1], [0, 0, 1, 1], [], []>} : vector<128x64xbf16>, vector<64x256xbf16>, vector<128x256xf32> -> vector<128x256xf32>
    %c0_4 = arith.constant 0 : index
    %c0_5 = arith.constant 0 : index
    %5 = vector.load %arg5[%c0_4, %c0_5] : memref<128x1xf32, #tpu.memory_space<vmem>>, vector<128x1xf32>
    %6 = vector.broadcast %5 : vector<128x1xf32> to vector<128x256xf32>
    %7 = arith.mulf %4, %6 : vector<128x256xf32>
    %c0_6 = arith.constant 0 : index
    %c0_7 = arith.constant 0 : index
    %8 = vector.load %arg6[%c0_6, %c0_7] : memref<128x1xf32, #tpu.memory_space<vmem>>, vector<128x1xf32>
    %9 = vector.broadcast %8 : vector<128x1xf32> to vector<128x256xf32>
    %10 = arith.addf %7, %9 : vector<128x256xf32>
    %cst_8 = arith.constant 0.000000e+00 : f32
    %11 = vector.broadcast %cst_8 : f32 to vector<128x256xf32>
    %12 = arith.cmpf oge, %10, %11 : vector<128x256xf32>
    %c0_9 = arith.constant 0 : index
    %c0_10 = arith.constant 0 : index
    %13 = vector.load %arg7[%c0_9, %c0_10] : memref<128x1xf32, #tpu.memory_space<vmem>>, vector<128x1xf32>
    %14 = vector.broadcast %13 : vector<128x1xf32> to vector<128x256xf32>
    %15 = arith.mulf %10, %14 : vector<128x256xf32>
    %16 = arith.select %12, %10, %15 : vector<128x256xi1>, vector<128x256xf32>
    %c0_11 = arith.constant 0 : index
    %c0_12 = arith.constant 0 : index
    %c0_13 = arith.constant 0 : index
    %17 = vector.load %arg8[%c0_11, %c0_12, %c0_13] : memref<1x128x256xf32, #tpu.memory_space<vmem>>, vector<1x128x256xf32>
    %18 = vector.shape_cast %17 : vector<1x128x256xf32> to vector<128x256xf32>
    %19 = vector.shape_cast %16 : vector<128x256xf32> to vector<1x128x256xf32>
    tpu.vector_store %arg8[%c0_11, %c0_12, %c0_13], %19 {strides = array<i32>} : memref<1x128x256xf32, #tpu.memory_space<vmem>>, vector<1x128x256xf32>,
    return
  }
  func.func @transform_0(%arg0: i32, %arg1: i32, %arg2: i32) -> (i32, i32, i32) {
    %c0_i32 = arith.constant 0 : i32
    %c0_i32_0 = arith.constant 0 : i32
    return %arg0, %c0_i32, %arg2 : i32, i32, i32
  }
  func.func @transform_1(%arg0: i32, %arg1: i32, %arg2: i32) -> (i32, i32) {
    %c0_i32 = arith.constant 0 : i32
    %c0_i32_0 = arith.constant 0 : i32
    return %arg1, %c0_i32 : i32, i32
  }
  func.func @transform_2(%arg0: i32, %arg1: i32, %arg2: i32) -> (i32, i32) {
    %c0_i32 = arith.constant 0 : i32
    %c0_i32_0 = arith.constant 0 : i32
    return %arg1, %c0_i32 : i32, i32
  }
  func.func @transform_3(%arg0: i32, %arg1: i32, %arg2: i32) -> (i32, i32) {
    %c0_i32 = arith.constant 0 : i32
    %c0_i32_0 = arith.constant 0 : i32
    return %arg1, %c0_i32 : i32, i32
  }
  func.func @transform_4(%arg0: i32, %arg1: i32, %arg2: i32) -> (i32, i32) {
    %c0_i32 = arith.constant 0 : i32
    %c0_i32_0 = arith.constant 0 : i32
    return %arg1, %c0_i32 : i32, i32
  }
  func.func @transform_5(%arg0: i32, %arg1: i32, %arg2: i32) -> (i32, i32, i32) {
    %c0_i32 = arith.constant 0 : i32
    return %arg0, %arg1, %arg2 : i32, i32, i32
  }
}

</mosaic_0001>

<llo_original>
// kernel: tpu_custom_call.1
$region0: #{tpu_custom_call.1}
  #allocation0 [shape = 'u32[]', space=smem, size = 0x4, offset = 0x4, fixed_abs, tag = 'smem constant byte address 0x4 - core index']
  #allocation1 [shape = 'u32[144,128]{1,0:T(1,128)}', space=vmem, size = 0x12000, scoped, tag = 'internal scratch']
  %s0 = inlined_call_operand.vmem [shape: f32[2,64,256], index: 0, kind: input, shape index: {}]
  %s1 = inlined_call_operand.vmem [shape: bf16[128,64], index: 1, kind: input, shape index: {}]
  %s2 = inlined_call_operand.vmem [shape: f32[128,1], index: 2, kind: input, shape index: {}]
  %s3 = inlined_call_operand.vmem [shape: f32[128,1], index: 3, kind: input, shape index: {}]
  %s4 = inlined_call_operand.vmem [shape: f32[128,1], index: 4, kind: input, shape index: {}]
  %s5 = inlined_call_operand.hbm [shape: f32[2,128,256], index: 5, kind: output, shape index: {}]
  %s6 = sld [smem:[#allocation0]]
  $region53: #{tpu_custom_call.1} parent=0
    _
  %s8 = ssub.s32 1, %s6
  %s9 = scalar_select 0, %s8, %s6
  $region1: #{tpu_custom_call.1} parent=0
    #allocation2 [shape = 'u8[262144]{0}', space=vmem, size = 0x40000, scoped, tag = 'output window, operand 0']
    #allocation3 [shape = 's32[2]{0}', space=sflag, size = 0x8, scoped, tag = 'scoped memory for tpu_custom_call.1']
    %10 = vsyncpa [#allocation3], 0
    %s11 = scalar_lea.sflag [#allocation3], 1
    %12 = vsyncpa %s11, 0
    loop: start=0, step=1, limit=4
    $region2: #{tpu_custom_call.1} parent=1 // loop_pre_header
      _
    $region3: #{tpu_custom_call.1} parent=1 // loop_header
      %s14 = sphi 0, %s18
      %p15 = scmp.ge.s32.totalorder %s14, 4
      %s21 = sphi 0, %s40
      %s22 = sphi 0, %s36
      %s23 = sphi 0, %s32
      %s24 = sphi 0, %s21
      %s25 = sphi 0, %s22
      %s26 = sphi 0, %s23
      %s27 = sphi 0, %s24
      %s28 = sphi 0, %s25
      %s29 = sphi 0, %s26
      %s45 = sphi 0, %s47
      %s48 = sphi 0, %s45
      %s49 = sphi 0, %s48
      %s65 = sphi 0, %s49
      %s71 = sphi 0, %s73
      %s74 = sphi 0, %s71
      %s75 = sphi 0, %s74
      %s91 = sphi 0, %s75
      %s97 = sphi 0, %s99
      %s100 = sphi 0, %s97
      %s101 = sphi 0, %s100
      %s117 = sphi 0, %s101
      %s123 = sphi 0, %s125
      %s126 = sphi 0, %s123
      %s127 = sphi 0, %s126
      %s143 = sphi 0, %s127
      %s149 = sphi 0, %s151
      %s152 = sphi 0, %s149
      %s153 = sphi 0, %s152
      %s169 = sphi 0, %s153
      %s179 = sphi 0, %s181
      %s182 = sphi 0, %s179
      %s183 = sphi 0, %s182
      %s199 = sphi 0, %s183
    $region4: #{tpu_custom_call.1} parent=1 // loop_header_branch
      %17 = sbr.rel (%p15) target = $region8
    $region5: #{tpu_custom_call.1} parent=1 // loop_body
      %s19 = ssub.s32 %s14, 1
      %s20 = ssub.s32 %s14, 2
      %s30 = sadd.s32 1, %s23
      %p31 = scmp.ge.s32.totalorder %s30, 1
      %s32 = scalar_select %p31, 0, %s30
      %s33 = sadd.s32 1, %s22
      %s34 = scalar_select %p31, %s33, %s22
      %p35 = scmp.ge.s32.totalorder %s34, 1
      %s36 = scalar_select %p35, 0, %s34
      %s37 = sadd.s32 1, %s21
      %s38 = scalar_select %p35, %s37, %s21
      %p39 = scmp.ge.s32.totalorder %s38, 2
      %s40 = scalar_select %p39, 0, %s38
      %s41 = ssub.s32 %s21, %s40
      %s42 = ssub.s32 %s23, %s32
      %s43 = sor.u32 %s41, %s42
      %p44 = scmp.eq.s32.totalorder %s43, 0
      %s46 = sadd.s32 %s45, 1
      %s47 = scalar_select %p44, %s45, %s46
      %p50 = pneg %p44
      %p51 = scmp.eq.s32.totalorder %s14, 1
      %p52 = por %p50, %p51
      %p53 = scmp.ne.s32.totalorder %s45, %s48
      %p54 = scmp.eq.s32.totalorder %s14, 0
      %p55 = por %p53, %p54
      %p56 = scmp.ne.s32.totalorder %s45, %s48
      %p57 = scmp.eq.s32.totalorder %s19, 1
      %p58 = por %p56, %p57
      %p59 = scmp.ne.s32.totalorder %s48, %s49
      %p60 = scmp.eq.s32.totalorder %s19, 0
      %p61 = por %p59, %p60
      %p62 = scmp.ne.s32.totalorder %s48, %s49
      %p63 = scmp.eq.s32.totalorder %s20, 1
      %p64 = por %p62, %p63
      %p66 = scmp.ne.s32.totalorder %s49, %s65
      %p67 = scmp.eq.s32.totalorder %s20, 0
      %p68 = por %p66, %p67
      %s69 = ssub.s32 %s22, %s36
      %p70 = scmp.eq.s32.totalorder %s69, 0
      %s72 = sadd.s32 %s71, 1
      %s73 = scalar_select %p70, %s71, %s72
      %p76 = pneg %p70
      %p77 = scmp.eq.s32.totalorder %s14, 1
      %p78 = por %p76, %p77
      %p79 = scmp.ne.s32.totalorder %s71, %s74
      %p80 = scmp.eq.s32.totalorder %s14, 0
      %p81 = por %p79, %p80
      %p82 = scmp.ne.s32.totalorder %s71, %s74
      %p83 = scmp.eq.s32.totalorder %s19, 1
      %p84 = por %p82, %p83
      %p85 = scmp.ne.s32.totalorder %s74, %s75
      %p86 = scmp.eq.s32.totalorder %s19, 0
      %p87 = por %p85, %p86
      %p88 = scmp.ne.s32.totalorder %s74, %s75
      %p89 = scmp.eq.s32.totalorder %s20, 1
      %p90 = por %p88, %p89
      %p92 = scmp.ne.s32.totalorder %s75, %s91
      %p93 = scmp.eq.s32.totalorder %s20, 0
      %p94 = por %p92, %p93
      %s95 = ssub.s32 %s22, %s36
      %p96 = scmp.eq.s32.totalorder %s95, 0
      %s98 = sadd.s32 %s97, 1
      %s99 = scalar_select %p96, %s97, %s98
      %p102 = pneg %p96
      %p103 = scmp.eq.s32.totalorder %s14, 1
      %p104 = por %p102, %p103
      %p105 = scmp.ne.s32.totalorder %s97, %s100
      %p106 = scmp.eq.s32.totalorder %s14, 0
      %p107 = por %p105, %p106
      %p108 = scmp.ne.s32.totalorder %s97, %s100
      %p109 = scmp.eq.s32.totalorder %s19, 1
      %p110 = por %p108, %p109
      %p111 = scmp.ne.s32.totalorder %s100, %s101
      %p112 = scmp.eq.s32.totalorder %s19, 0
      %p113 = por %p111, %p112
      %p114 = scmp.ne.s32.totalorder %s100, %s101
      %p115 = scmp.eq.s32.totalorder %s20, 1
      %p116 = por %p114, %p115
      %p118 = scmp.ne.s32.totalorder %s101, %s117
      %p119 = scmp.eq.s32.totalorder %s20, 0
      %p120 = por %p118, %p119
      %s121 = ssub.s32 %s22, %s36
      %p122 = scmp.eq.s32.totalorder %s121, 0
      %s124 = sadd.s32 %s123, 1
      %s125 = scalar_select %p122, %s123, %s124
      %p128 = pneg %p122
      %p129 = scmp.eq.s32.totalorder %s14, 1
      %p130 = por %p128, %p129
      %p131 = scmp.ne.s32.totalorder %s123, %s126
      %p132 = scmp.eq.s32.totalorder %s14, 0
      %p133 = por %p131, %p132
      %p134 = scmp.ne.s32.totalorder %s123, %s126
      %p135 = scmp.eq.s32.totalorder %s19, 1
      %p136 = por %p134, %p135
      %p137 = scmp.ne.s32.totalorder %s126, %s127
      %p138 = scmp.eq.s32.totalorder %s19, 0
      %p139 = por %p137, %p138
      %p140 = scmp.ne.s32.totalorder %s126, %s127
      %p141 = scmp.eq.s32.totalorder %s20, 1
      %p142 = por %p140, %p141
      %p144 = scmp.ne.s32.totalorder %s127, %s143
      %p145 = scmp.eq.s32.totalorder %s20, 0
      %p146 = por %p144, %p145
      %s147 = ssub.s32 %s22, %s36
      %p148 = scmp.eq.s32.totalorder %s147, 0
      %s150 = sadd.s32 %s149, 1
      %s151 = scalar_select %p148, %s149, %s150
      %p154 = pneg %p148
      %p155 = scmp.eq.s32.totalorder %s14, 1
      %p156 = por %p154, %p155
      %p157 = scmp.ne.s32.totalorder %s149, %s152
      %p158 = scmp.eq.s32.totalorder %s14, 0
      %p159 = por %p157, %p158
      %p160 = scmp.ne.s32.totalorder %s149, %s152
      %p161 = scmp.eq.s32.totalorder %s19, 1
      %p162 = por %p160, %p161
      %p163 = scmp.ne.s32.totalorder %s152, %s153
      %p164 = scmp.eq.s32.totalorder %s19, 0
      %p165 = por %p163, %p164
      %p166 = scmp.ne.s32.totalorder %s152, %s153
      %p167 = scmp.eq.s32.totalorder %s20, 1
      %p168 = por %p166, %p167
      %p170 = scmp.ne.s32.totalorder %s153, %s169
      %p171 = scmp.eq.s32.totalorder %s20, 0
      %p172 = por %p170, %p171
      %s173 = ssub.s32 %s21, %s40
      %s174 = ssub.s32 %s22, %s36
      %s175 = sor.u32 %s173, %s174
      %s176 = ssub.s32 %s23, %s32
      %s177 = sor.u32 %s175, %s176
      %p178 = scmp.eq.s32.totalorder %s177, 0
      %s180 = sadd.s32 %s179, 1
      %s181 = scalar_select %p178, %s179, %s180
      %p184 = pneg %p178
      %p185 = scmp.eq.s32.totalorder %s14, 1
      %p186 = por %p184, %p185
      %p187 = scmp.ne.s32.totalorder %s179, %s182
      %p188 = scmp.eq.s32.totalorder %s14, 0
      %p189 = por %p187, %p188
      %p190 = scmp.ne.s32.totalorder %s179, %s182
      %p191 = scmp.eq.s32.totalorder %s19, 1
      %p192 = por %p190, %p191
      %p193 = scmp.ne.s32.totalorder %s182, %s183
      %p194 = scmp.eq.s32.totalorder %s19, 0
      %p195 = por %p193, %p194
      %p196 = scmp.ne.s32.totalorder %s182, %s183
      %p197 = scmp.eq.s32.totalorder %s20, 1
      %p198 = por %p196, %p197
      %p200 = scmp.ne.s32.totalorder %s183, %s199
      %p201 = scmp.eq.s32.totalorder %s20, 0
      %p202 = por %p200, %p201
      %p203 = scmp.le.s32.totalorder 1, %s14
      %p204 = scmp.lt.s32.totalorder %s14, 3
      %p205 = pnand %p203, %p204
      %p206 = pneg %p205
      // Predicated region
      $region9: #{tpu_custom_call.1} parent=5 // pred_check
        _
      $region10: #{tpu_custom_call.1} parent=5 // pred_check_branch
        %208 = sbr.rel (%p205) target = $region12
      $region11: #{tpu_custom_call.1} parent=5 // pred_region
        %s209 = ssub.s32 %s14, 1
        // Predicated region
        $region13: #{tpu_custom_call.1} parent=11 // pred_check
          %p210 = pneg %p87
        $region14: #{tpu_custom_call.1} parent=11 // pred_check_branch
          %212 = sbr.rel (%p210) target = $region16
        $region15: #{tpu_custom_call.1} parent=11 // pred_region
          %s213 = smul.u32 16, %s25
          %p214 = scmp.lt.s32.totalorder %s213, 15
          %s215 = scalar_select %p214, %s213, 15
          %s216 = smul.addr %s215, 4
          %s217 = scalar_lea.vmem %s1, %s216
          %s218 = smul.u32 16, %s25
        $region16: #{tpu_custom_call.1} parent=11 // pred_fallthru
          _
        // Predicated region
        $region17: #{tpu_custom_call.1} parent=11 // pred_check
          %p219 = pneg %p113
        $region18: #{tpu_custom_call.1} parent=11 // pred_check_branch
          %221 = sbr.rel (%p219) target = $region20
        $region19: #{tpu_custom_call.1} parent=11 // pred_region
          %s222 = smul.u32 16, %s25
          %p223 = scmp.lt.s32.totalorder %s222, 15
          %s224 = scalar_select %p223, %s222, 15
          %s225 = smul.addr %s224, 8
          %s226 = scalar_lea.vmem %s2, %s225
          %s227 = smul.u32 16, %s25
        $region20: #{tpu_custom_call.1} parent=11 // pred_fallthru
          _
        // Predicated region
        $region21: #{tpu_custom_call.1} parent=11 // pred_check
          %p228 = pneg %p139
        $region22: #{tpu_custom_call.1} parent=11 // pred_check_branch
          %230 = sbr.rel (%p228) target = $region24
        $region23: #{tpu_custom_call.1} parent=11 // pred_region
          %s231 = smul.u32 16, %s25
          %p232 = scmp.lt.s32.totalorder %s231, 15
          %s233 = scalar_select %p232, %s231, 15
          %s234 = smul.addr %s233, 8
          %s235 = scalar_lea.vmem %s3, %s234
          %s236 = smul.u32 16, %s25
        $region24: #{tpu_custom_call.1} parent=11 // pred_fallthru
          _
        // Predicated region
        $region25: #{tpu_custom_call.1} parent=11 // pred_check
          %p237 = pneg %p165
        $region26: #{tpu_custom_call.1} parent=11 // pred_check_branch
          %239 = sbr.rel (%p237) target = $region28
        $region27: #{tpu_custom_call.1} parent=11 // pred_region
          %s240 = smul.u32 16, %s25
          %p241 = scmp.lt.s32.totalorder %s240, 15
          %s242 = scalar_select %p241, %s240, 15
          %s243 = smul.addr %s242, 8
          %s244 = scalar_lea.vmem %s4, %s243
          %s245 = smul.u32 16, %s25
        $region28: #{tpu_custom_call.1} parent=11 // pred_fallthru
          _
      $region12: #{tpu_custom_call.1} parent=5 // pred_fallthru
        _
      %p246 = scmp.lt.s32.totalorder %s14, 2
      // Predicated region
      $region29: #{tpu_custom_call.1} parent=5 // pred_check
        %p247 = pneg %p246
      $region30: #{tpu_custom_call.1} parent=5 // pred_check_branch
        %249 = sbr.rel (%p247) target = $region32
      $region31: #{tpu_custom_call.1} parent=5 // pred_region
        // Predicated region
        $region33: #{tpu_custom_call.1} parent=31 // pred_check
          %p250 = pneg %p55
        $region34: #{tpu_custom_call.1} parent=31 // pred_check_branch
          %252 = sbr.rel (%p250) target = $region36
        $region35: #{tpu_custom_call.1} parent=31 // pred_region
          %s253 = smul.u32 2, %s23
          %p254 = scmp.lt.s32.totalorder %s21, 1
          %s255 = scalar_select %p254, %s21, 1
          %p256 = scmp.lt.s32.totalorder %s253, 1
          %s257 = scalar_select %p256, %s253, 1
          %s258 = smul.addr %s255, 16
          %s259 = sadd.s32 %s257, %s258
          %s260 = smul.addr %s259, 8
          %s261 = scalar_lea.vmem %s0, %s260
          %s262 = smul.u32 2, %s23
        $region36: #{tpu_custom_call.1} parent=31 // pred_fallthru
          _
      $region32: #{tpu_custom_call.1} parent=5 // pred_fallthru
        _
      %p263 = scmp.le.s32.totalorder 1, %s14
      %p264 = scmp.lt.s32.totalorder %s14, 3
      %p265 = pnand %p263, %p264
      %p266 = pneg %p265
      // Predicated region
      $region37: #{tpu_custom_call.1} parent=5 // pred_check
        _
      $region38: #{tpu_custom_call.1} parent=5 // pred_check_branch
        %268 = sbr.rel (%p265) target = $region40
      $region39: #{tpu_custom_call.1} parent=5 // pred_region
        %s269 = ssub.s32 %s14, 1
        %s270 = smul.u32 2, %s26
        %p271 = scmp.lt.s32.totalorder %s24, 1
        %s272 = scalar_select %p271, %s24, 1
        %p273 = scmp.lt.s32.totalorder %s270, 1
        %s274 = scalar_select %p273, %s270, 1
        %s275 = smul.addr %s272, 16
        %s276 = sadd.s32 %s274, %s275
        %s277 = smul.addr %s276, 8
        %s278 = scalar_lea.vmem %s0, %s277
        %p279 = pneg %p61
        %p280 = pneg %p58
        %s281 = smul.u32 16, %s25
        %p282 = scmp.lt.s32.totalorder %s281, 15
        %s283 = scalar_select %p282, %s281, 15
        %s284 = smul.addr %s283, 4
        %s285 = scalar_lea.vmem %s1, %s284
        %p286 = pneg %p87
        %p287 = pneg %p84
        %s288 = smul.u32 16, %s25
        %p289 = scmp.lt.s32.totalorder %s288, 15
        %s290 = scalar_select %p289, %s288, 15
        %s291 = smul.addr %s290, 8
        %s292 = scalar_lea.vmem %s2, %s291
        %p293 = pneg %p113
        %p294 = pneg %p110
        %s295 = smul.u32 16, %s25
        %p296 = scmp.lt.s32.totalorder %s295, 15
        %s297 = scalar_select %p296, %s295, 15
        %s298 = smul.addr %s297, 8
        %s299 = scalar_lea.vmem %s3, %s298
        %p300 = pneg %p139
        %p301 = pneg %p136
        %s302 = smul.u32 16, %s25
        %p303 = scmp.lt.s32.totalorder %s302, 15
        %s304 = scalar_select %p303, %s302, 15
        %s305 = smul.addr %s304, 8
        %s306 = scalar_lea.vmem %s4, %s305
        %p307 = pneg %p165
        %p308 = pneg %p162
        %p309 = pneg %p195
        %p310 = pneg %p192
        %s311 = sand.u32 %s182, 1
        %s312 = scalar_lea.sflag [#allocation3], %s311
        %s313 = sand.u32 %s182, 1
        %s314 = smul.addr %s313, 256
        %s315 = scalar_lea.vmem [#allocation2], %s314
        %s316 = smul.u32 2, %s26
        %p317 = scmp.lt.s32.totalorder %s24, 1
        %s318 = scalar_select %p317, %s24, 1
        %p319 = scmp.lt.s32.totalorder %s316, 1
        %s320 = scalar_select %p319, %s316, 1
        %s321 = smul.addr %s318, 16
        %s322 = sadd.s32 %s320, %s321
        %s323 = smul.addr %s322, 8
        %s324 = scalar_lea.vmem %s0, %s323
        %s325 = smul.u32 2, %s26
        %s326 = smul.u32 16, %s25
        %p327 = scmp.lt.s32.totalorder %s326, 15
        %s328 = scalar_select %p327, %s326, 15
        %s329 = smul.addr %s328, 4
        %s330 = scalar_lea.vmem %s1, %s329
        %s331 = smul.u32 16, %s25
        %s332 = smul.u32 16, %s25
        %p333 = scmp.lt.s32.totalorder %s332, 15
        %s334 = scalar_select %p333, %s332, 15
        %s335 = smul.addr %s334, 8
        %s336 = scalar_lea.vmem %s2, %s335
        %s337 = smul.u32 16, %s25
        %s338 = smul.u32 16, %s25
        %p339 = scmp.lt.s32.totalorder %s338, 15
        %s340 = scalar_select %p339, %s338, 15
        %s341 = smul.addr %s340, 8
        %s342 = scalar_lea.vmem %s3, %s341
        %s343 = smul.u32 16, %s25
        %s344 = smul.u32 16, %s25
        %p345 = scmp.lt.s32.totalorder %s344, 15
        %s346 = scalar_select %p345, %s344, 15
        %s347 = smul.addr %s346, 8
        %s348 = scalar_lea.vmem %s4, %s347
        %s349 = smul.u32 16, %s25
        %s350 = smul.u32 16, %s25
        %s351 = smul.u32 2, %s26
        %v353 = vld [vmem:[%s324] sm:$0xff]
        %v354 = vld [vmem:[%s324 + $0x8] sm:$0xff]
        %v355 = vld [vmem:[%s324 + $0x10] sm:$0xff]
        %v356 = vld [vmem:[%s324 + $0x18] sm:$0xff]
        %v357 = vld [vmem:[%s324 + $0x20] sm:$0xff]
        %v358 = vld [vmem:[%s324 + $0x28] sm:$0xff]
        %v359 = vld [vmem:[%s324 + $0x30] sm:$0xff]
        %v360 = vld [vmem:[%s324 + $0x38] sm:$0xff]
        %v361 = vld [vmem:[%s324 + $0x40] sm:$0xff]
        %v362 = vld [vmem:[%s324 + $0x48] sm:$0xff]
        %v363 = vld [vmem:[%s324 + $0x50] sm:$0xff]
        %v364 = vld [vmem:[%s324 + $0x58] sm:$0xff]
        %v365 = vld [vmem:[%s324 + $0x60] sm:$0xff]
        %v366 = vld [vmem:[%s324 + $0x68] sm:$0xff]
        %v367 = vld [vmem:[%s324 + $0x70] sm:$0xff]
        %v368 = vld [vmem:[%s324 + $0x78] sm:$0xff]
        %v369 = vpack.c.bf16 %v355, %v353
        %v370 = vpack.c.bf16 %v356, %v354
        %v371 = vpack.c.bf16 %v359, %v357
        %v372 = vpack.c.bf16 %v360, %v358
        %v373 = vpack.c.bf16 %v363, %v361
        %v374 = vpack.c.bf16 %v364, %v362
        %v375 = vpack.c.bf16 %v367, %v365
        %v376 = vpack.c.bf16 %v368, %v366
        %v377 = vld [vmem:[%s330] sm:$0xf]
        %v378 = vld [vmem:[%s330 + $0x4] sm:$0xf]
        %v379 = vld [vmem:[%s330 + $0x8] sm:$0xf]
        %v380 = vld [vmem:[%s330 + $0xc] sm:$0xf]
        %v381 = vld [vmem:[%s330 + $0x10] sm:$0xf]
        %v382 = vld [vmem:[%s330 + $0x14] sm:$0xf]
        %v383 = vld [vmem:[%s330 + $0x18] sm:$0xf]
        %v384 = vld [vmem:[%s330 + $0x1c] sm:$0xf]
        %v385 = vld [vmem:[%s330 + $0x20] sm:$0xf]
        %v386 = vld [vmem:[%s330 + $0x24] sm:$0xf]
        %v387 = vld [vmem:[%s330 + $0x28] sm:$0xf]
        %v388 = vld [vmem:[%s330 + $0x2c] sm:$0xf]
        %v389 = vld [vmem:[%s330 + $0x30] sm:$0xf]
        %v390 = vld [vmem:[%s330 + $0x34] sm:$0xf]
        %v391 = vld [vmem:[%s330 + $0x38] sm:$0xf]
        %v392 = vld [vmem:[%s330 + $0x3c] sm:$0xf]
        %v409 = vunpack.c.l.b16 %v377
        %v410 = vunpack.c.l.b16 %v378
        %v411 = vunpack.c.l.b16 %v379
        %v412 = vunpack.c.l.b16 %v380
        %v413 = vunpack.c.l.b16 %v381
        %v414 = vunpack.c.l.b16 %v382
        %v415 = vunpack.c.l.b16 %v383
        %v416 = vunpack.c.l.b16 %v384
        %v417 = vunpack.c.l.b16 %v385
        %v418 = vunpack.c.l.b16 %v386
        %v419 = vunpack.c.l.b16 %v387
        %v420 = vunpack.c.l.b16 %v388
        %v421 = vunpack.c.l.b16 %v389
        %v422 = vunpack.c.l.b16 %v390
        %v423 = vunpack.c.l.b16 %v391
        %v424 = vunpack.c.l.b16 %v392
        %v425 = vpack.c.b16 %v410, %v409
        %v426 = vpack.c.b16 %v412, %v411
        %v427 = vpack.c.b16 %v414, %v413
        %v428 = vpack.c.b16 %v416, %v415
        %v429 = vpack.c.b16 %v418, %v417
        %v430 = vpack.c.b16 %v420, %v419
        %v431 = vpack.c.b16 %v422, %v421
        %v432 = vpack.c.b16 %v424, %v423
        %vm433 = vcmask 523264
        %v435 = vsel %vm433, %v425, 0
        %v438 = vsel %vm433, %v426, 0
        %v441 = vsel %vm433, %v427, 0
        %v444 = vsel %vm433, %v428, 0
        %v447 = vsel %vm433, %v429, 0
        %v450 = vsel %vm433, %v430, 0
        %v453 = vsel %vm433, %v431, 0
        %v456 = vsel %vm433, %v432, 0
        %458 = vmatprep.subr.bf16.mxu0 0
        %459 = vmatpush1.bf16.msra.mxu0 0
        %460 = vmatprep.subr.bf16.mxu0 0
        %461 = vmatpush1.bf16.msra.mxu0 0
        %462 = vmatprep.subr.bf16.mxu0 0
        %463 = vmatpush1.bf16.msra.mxu0 0
        %464 = vmatprep.subr.bf16.mxu0 0
        %465 = vmatpush1.bf16.msra.mxu0 0
        %466 = vmatprep.subr.bf16.mxu0 %v376
        %467 = vmatpush1.bf16.msra.mxu0 %v375
        %468 = vmatprep.subr.bf16.mxu0 %v374
        %469 = vmatpush1.bf16.msra.mxu0 %v373
        %470 = vmatprep.subr.bf16.mxu0 %v372
        %471 = vmatpush1.bf16.msra.mxu0 %v371
        %472 = vmatprep.subr.bf16.mxu0 %v370
        %473 = vmatpush1.bf16.msra.mxu0 %v369
        %474 = vmatprep.subr.bf16.mxu0 0
        %475 = vmatpush2.bf16.msra.mxu0 0
        %476 = vmatprep.subr.bf16.mxu0 0
        %477 = vmatpush2.bf16.msra.mxu0 0
        %478 = vmatprep.subr.bf16.mxu0 0
        %479 = vmatpush2.bf16.msra.mxu0 0
        %480 = vmatprep.subr.bf16.mxu0 0
        %481 = vmatpush2.bf16.msra.mxu0 0
        %482 = vmatprep.subr.bf16.mxu0 0
        %483 = vmatpush2.bf16.msra.mxu0 0
        %484 = vmatprep.subr.bf16.mxu0 0
        %485 = vmatpush2.bf16.msra.mxu0 0
        %486 = vmatprep.subr.bf16.mxu0 0
        %487 = vmatpush2.bf16.msra.mxu0 0
        %488 = vmatprep.subr.bf16.mxu0 0
        %489 = vmatpush2.bf16.msra.mxu0 0
        %490 = vmatprep.mubr.bf16.mxu0 0
        %491 = vmatmul.mubr.bf16.gmra.mxu0 %v435
        %v492 = vpop.f32.mrf.mxu0
        %v493 = vadd.f32 0.0, %v492
        %v494 = vpop.f32.mrf.mxu0
        %v495 = vadd.f32 0.0, %v494
        %v496 = vpop.f32.mrf.mxu0
        %v497 = vadd.f32 0.0, %v496
        %v498 = vpop.f32.mrf.mxu0
        %v499 = vadd.f32 0.0, %v498
        %500 = vmatprep.mubr.bf16.mxu0 0
        %501 = vmatmul.mubr.bf16.gmra.mxu0 %v438
        %v502 = vpop.f32.mrf.mxu0
        %v503 = vadd.f32 0.0, %v502
        %v504 = vpop.f32.mrf.mxu0
        %v505 = vadd.f32 0.0, %v504
        %v506 = vpop.f32.mrf.mxu0
        %v507 = vadd.f32 0.0, %v506
        %v508 = vpop.f32.mrf.mxu0
        %v509 = vadd.f32 0.0, %v508
        %510 = vmatprep.mubr.bf16.mxu0 0
        %511 = vmatmul.mubr.bf16.gmra.mxu0 %v441
        %v512 = vpop.f32.mrf.mxu0
        %v513 = vadd.f32 0.0, %v512
        %v514 = vpop.f32.mrf.mxu0
        %v515 = vadd.f32 0.0, %v514
        %v516 = vpop.f32.mrf.mxu0
        %v517 = vadd.f32 0.0, %v516
        %v518 = vpop.f32.mrf.mxu0
        %v519 = vadd.f32 0.0, %v518
        %520 = vmatprep.mubr.bf16.mxu0 0
        %521 = vmatmul.mubr.bf16.gmra.mxu0 %v444
        %v522 = vpop.f32.mrf.mxu0
        %v523 = vadd.f32 0.0, %v522
        %v524 = vpop.f32.mrf.mxu0
        %v525 = vadd.f32 0.0, %v524
        %v526 = vpop.f32.mrf.mxu0
        %v527 = vadd.f32 0.0, %v526
        %v528 = vpop.f32.mrf.mxu0
        %v529 = vadd.f32 0.0, %v528
        %530 = vmatprep.mubr.bf16.mxu0 0
        %531 = vmatmul.mubr.bf16.gmra.mxu0 %v447
        %v532 = vpop.f32.mrf.mxu0
        %v533 = vadd.f32 0.0, %v532
        %v534 = vpop.f32.mrf.mxu0
        %v535 = vadd.f32 0.0, %v534
        %v536 = vpop.f32.mrf.mxu0
        %v537 = vadd.f32 0.0, %v536
        %v538 = vpop.f32.mrf.mxu0
        %v539 = vadd.f32 0.0, %v538
        %540 = vmatprep.mubr.bf16.mxu0 0
        %541 = vmatmul.mubr.bf16.gmra.mxu0 %v450
        %v542 = vpop.f32.mrf.mxu0
        %v543 = vadd.f32 0.0, %v542
        %v544 = vpop.f32.mrf.mxu0
        %v545 = vadd.f32 0.0, %v544
        %v546 = vpop.f32.mrf.mxu0
        %v547 = vadd.f32 0.0, %v546
        %v548 = vpop.f32.mrf.mxu0
        %v549 = vadd.f32 0.0, %v548
        %550 = vmatprep.mubr.bf16.mxu0 0
        %551 = vmatmul.mubr.bf16.gmra.mxu0 %v453
        %v552 = vpop.f32.mrf.mxu0
        %v553 = vadd.f32 0.0, %v552
        %v554 = vpop.f32.mrf.mxu0
        %v555 = vadd.f32 0.0, %v554
        %v556 = vpop.f32.mrf.mxu0
        %v557 = vadd.f32 0.0, %v556
        %v558 = vpop.f32.mrf.mxu0
        %v559 = vadd.f32 0.0, %v558
        %560 = vmatprep.mubr.bf16.mxu0 0
        %561 = vmatmul.mubr.bf16.gmra.mxu0 %v456
        %v562 = vpop.f32.mrf.mxu0
        %v563 = vadd.f32 0.0, %v562
        %v564 = vpop.f32.mrf.mxu0
        %v565 = vadd.f32 0.0, %v564
        %v566 = vpop.f32.mrf.mxu0
        %v567 = vadd.f32 0.0, %v566
        %v568 = vpop.f32.mrf.mxu0
        %v569 = vadd.f32 0.0, %v568
        %570 = vdwg.mxu0
        %v571 = vld [vmem:[%s336] sm:$0xff]
        %v572 = vld [vmem:[%s336 + $0x8] sm:$0xff]
        %v573 = vld [vmem:[%s336 + $0x10] sm:$0xff]
        %v574 = vld [vmem:[%s336 + $0x18] sm:$0xff]
        %v575 = vld [vmem:[%s336 + $0x20] sm:$0xff]
        %v576 = vld [vmem:[%s336 + $0x28] sm:$0xff]
        %v577 = vld [vmem:[%s336 + $0x30] sm:$0xff]
        %v578 = vld [vmem:[%s336 + $0x38] sm:$0xff]
        %v579 = vld [vmem:[%s336 + $0x40] sm:$0xff]
        %v580 = vld [vmem:[%s336 + $0x48] sm:$0xff]
        %v581 = vld [vmem:[%s336 + $0x50] sm:$0xff]
        %v582 = vld [vmem:[%s336 + $0x58] sm:$0xff]
        %v583 = vld [vmem:[%s336 + $0x60] sm:$0xff]
        %v584 = vld [vmem:[%s336 + $0x68] sm:$0xff]
        %v585 = vld [vmem:[%s336 + $0x70] sm:$0xff]
        %v586 = vld [vmem:[%s336 + $0x78] sm:$0xff]
        %588 = vset.pattern.permute.xlu0 0
        %589 = vperm.xlu0 %588, %v571
        %v590 = vpop.permute.xlu0 %589
        %593 = vset.pattern.permute.xlu0 0
        %594 = vperm.xlu0 %593, %v572
        %v595 = vpop.permute.xlu0 %594
        %598 = vset.pattern.permute.xlu0 0
        %599 = vperm.xlu0 %598, %v573
        %v600 = vpop.permute.xlu0 %599
        %603 = vset.pattern.permute.xlu0 0
        %604 = vperm.xlu0 %603, %v574
        %v605 = vpop.permute.xlu0 %604
        %608 = vset.pattern.permute.xlu0 0
        %609 = vperm.xlu0 %608, %v575
        %v610 = vpop.permute.xlu0 %609
        %613 = vset.pattern.permute.xlu0 0
        %614 = vperm.xlu0 %613, %v576
        %v615 = vpop.permute.xlu0 %614
        %618 = vset.pattern.permute.xlu0 0
        %619 = vperm.xlu0 %618, %v577
        %v620 = vpop.permute.xlu0 %619
        %623 = vset.pattern.permute.xlu0 0
        %624 = vperm.xlu0 %623, %v578
        %v625 = vpop.permute.xlu0 %624
        %628 = vset.pattern.permute.xlu0 0
        %629 = vperm.xlu0 %628, %v579
        %v630 = vpop.permute.xlu0 %629
        %633 = vset.pattern.permute.xlu0 0
        %634 = vperm.xlu0 %633, %v580
        %v635 = vpop.permute.xlu0 %634
        %638 = vset.pattern.permute.xlu0 0
        %639 = vperm.xlu0 %638, %v581
        %v640 = vpop.permute.xlu0 %639
        %643 = vset.pattern.permute.xlu0 0
        %644 = vperm.xlu0 %643, %v582
        %v645 = vpop.permute.xlu0 %644
        %648 = vset.pattern.permute.xlu0 0
        %649 = vperm.xlu0 %648, %v583
        %v650 = vpop.permute.xlu0 %649
        %653 = vset.pattern.permute.xlu0 0
        %654 = vperm.xlu0 %653, %v584
        %v655 = vpop.permute.xlu0 %654
        %658 = vset.pattern.permute.xlu0 0
        %659 = vperm.xlu0 %658, %v585
        %v660 = vpop.permute.xlu0 %659
        %663 = vset.pattern.permute.xlu0 0
        %664 = vperm.xlu0 %663, %v586
        %v665 = vpop.permute.xlu0 %664
        %v667 = vmul.f32 %v493, %v590
        %v668 = vmul.f32 %v495, %v590
        %v669 = vmul.f32 %v497, %v595
        %v670 = vmul.f32 %v499, %v595
        %v671 = vmul.f32 %v503, %v600
        %v672 = vmul.f32 %v505, %v600
        %v673 = vmul.f32 %v507, %v605
        %v674 = vmul.f32 %v509, %v605
        %v675 = vmul.f32 %v513, %v610
        %v676 = vmul.f32 %v515, %v610
        %v677 = vmul.f32 %v517, %v615
        %v678 = vmul.f32 %v519, %v615
        %v679 = vmul.f32 %v523, %v620
        %v680 = vmul.f32 %v525, %v620
        %v681 = vmul.f32 %v527, %v625
        %v682 = vmul.f32 %v529, %v625
        %v683 = vmul.f32 %v533, %v630
        %v684 = vmul.f32 %v535, %v630
        %v685 = vmul.f32 %v537, %v635
        %v686 = vmul.f32 %v539, %v635
        %v687 = vmul.f32 %v543, %v640
        %v688 = vmul.f32 %v545, %v640
        %v689 = vmul.f32 %v547, %v645
        %v690 = vmul.f32 %v549, %v645
        %v691 = vmul.f32 %v553, %v650
        %v692 = vmul.f32 %v555, %v650
        %v693 = vmul.f32 %v557, %v655
        %v694 = vmul.f32 %v559, %v655
        %v695 = vmul.f32 %v563, %v660
        %v696 = vmul.f32 %v565, %v660
        %v697 = vmul.f32 %v567, %v665
        %v698 = vmul.f32 %v569, %v665
        %v699 = vld [vmem:[%s342] sm:$0xff]
        %v700 = vld [vmem:[%s342 + $0x8] sm:$0xff]
        %v701 = vld [vmem:[%s342 + $0x10] sm:$0xff]
        %v702 = vld [vmem:[%s342 + $0x18] sm:$0xff]
        %v703 = vld [vmem:[%s342 + $0x20] sm:$0xff]
        %v704 = vld [vmem:[%s342 + $0x28] sm:$0xff]
        %v705 = vld [vmem:[%s342 + $0x30] sm:$0xff]
        %v706 = vld [vmem:[%s342 + $0x38] sm:$0xff]
        %v707 = vld [vmem:[%s342 + $0x40] sm:$0xff]
        %v708 = vld [vmem:[%s342 + $0x48] sm:$0xff]
        %v709 = vld [vmem:[%s342 + $0x50] sm:$0xff]
        %v710 = vld [vmem:[%s342 + $0x58] sm:$0xff]
        %v711 = vld [vmem:[%s342 + $0x60] sm:$0xff]
        %v712 = vld [vmem:[%s342 + $0x68] sm:$0xff]
        %v713 = vld [vmem:[%s342 + $0x70] sm:$0xff]
        %v714 = vld [vmem:[%s342 + $0x78] sm:$0xff]
        %716 = vset.pattern.permute.xlu0 0
        %717 = vperm.xlu0 %716, %v699
        %v718 = vpop.permute.xlu0 %717
        %721 = vset.pattern.permute.xlu0 0
        %722 = vperm.xlu0 %721, %v700
        %v723 = vpop.permute.xlu0 %722
        %726 = vset.pattern.permute.xlu0 0
        %727 = vperm.xlu0 %726, %v701
        %v728 = vpop.permute.xlu0 %727
        %731 = vset.pattern.permute.xlu0 0
        %732 = vperm.xlu0 %731, %v702
        %v733 = vpop.permute.xlu0 %732
        %736 = vset.pattern.permute.xlu0 0
        %737 = vperm.xlu0 %736, %v703
        %v738 = vpop.permute.xlu0 %737
        %741 = vset.pattern.permute.xlu0 0
        %742 = vperm.xlu0 %741, %v704
        %v743 = vpop.permute.xlu0 %742
        %746 = vset.pattern.permute.xlu0 0
        %747 = vperm.xlu0 %746, %v705
        %v748 = vpop.permute.xlu0 %747
        %751 = vset.pattern.permute.xlu0 0
        %752 = vperm.xlu0 %751, %v706
        %v753 = vpop.permute.xlu0 %752
        %756 = vset.pattern.permute.xlu0 0
        %757 = vperm.xlu0 %756, %v707
        %v758 = vpop.permute.xlu0 %757
        %761 = vset.pattern.permute.xlu0 0
        %762 = vperm.xlu0 %761, %v708
        %v763 = vpop.permute.xlu0 %762
        %766 = vset.pattern.permute.xlu0 0
        %767 = vperm.xlu0 %766, %v709
        %v768 = vpop.permute.xlu0 %767
        %771 = vset.pattern.permute.xlu0 0
        %772 = vperm.xlu0 %771, %v710
        %v773 = vpop.permute.xlu0 %772
        %776 = vset.pattern.permute.xlu0 0
        %777 = vperm.xlu0 %776, %v711
        %v778 = vpop.permute.xlu0 %777
        %781 = vset.pattern.permute.xlu0 0
        %782 = vperm.xlu0 %781, %v712
        %v783 = vpop.permute.xlu0 %782
        %786 = vset.pattern.permute.xlu0 0
        %787 = vperm.xlu0 %786, %v713
        %v788 = vpop.permute.xlu0 %787
        %791 = vset.pattern.permute.xlu0 0
        %792 = vperm.xlu0 %791, %v714
        %v793 = vpop.permute.xlu0 %792
        %v795 = vadd.f32 %v667, %v718
        %v796 = vadd.f32 %v668, %v718
        %v797 = vadd.f32 %v669, %v723
        %v798 = vadd.f32 %v670, %v723
        %v799 = vadd.f32 %v671, %v728
        %v800 = vadd.f32 %v672, %v728
        %v801 = vadd.f32 %v673, %v733
        %v802 = vadd.f32 %v674, %v733
        %v803 = vadd.f32 %v675, %v738
        %v804 = vadd.f32 %v676, %v738
        %v805 = vadd.f32 %v677, %v743
        %v806 = vadd.f32 %v678, %v743
        %v807 = vadd.f32 %v679, %v748
        %v808 = vadd.f32 %v680, %v748
        %v809 = vadd.f32 %v681, %v753
        %v810 = vadd.f32 %v682, %v753
        %v811 = vadd.f32 %v683, %v758
        %v812 = vadd.f32 %v684, %v758
        %v813 = vadd.f32 %v685, %v763
        %v814 = vadd.f32 %v686, %v763
        %v815 = vadd.f32 %v687, %v768
        %v816 = vadd.f32 %v688, %v768
        %v817 = vadd.f32 %v689, %v773
        %v818 = vadd.f32 %v690, %v773
        %v819 = vadd.f32 %v691, %v778
        %v820 = vadd.f32 %v692, %v778
        %v821 = vadd.f32 %v693, %v783
        %v822 = vadd.f32 %v694, %v783
        %v823 = vadd.f32 %v695, %v788
        %v824 = vadd.f32 %v696, %v788
        %v825 = vadd.f32 %v697, %v793
        %v826 = vadd.f32 %v698, %v793
        %vm827 = vcmp.ge.f32.partialorder %v795, 0.0
        %vm828 = vcmp.ge.f32.partialorder %v796, 0.0
        %vm829 = vcmp.ge.f32.partialorder %v797, 0.0
        %vm830 = vcmp.ge.f32.partialorder %v798, 0.0
        %vm831 = vcmp.ge.f32.partialorder %v799, 0.0
        %vm832 = vcmp.ge.f32.partialorder %v800, 0.0
        %vm833 = vcmp.ge.f32.partialorder %v801, 0.0
        %vm834 = vcmp.ge.f32.partialorder %v802, 0.0
        %vm835 = vcmp.ge.f32.partialorder %v803, 0.0
        %vm836 = vcmp.ge.f32.partialorder %v804, 0.0
        %vm837 = vcmp.ge.f32.partialorder %v805, 0.0
        %vm838 = vcmp.ge.f32.partialorder %v806, 0.0
        %vm839 = vcmp.ge.f32.partialorder %v807, 0.0
        %vm840 = vcmp.ge.f32.partialorder %v808, 0.0
        %vm841 = vcmp.ge.f32.partialorder %v809, 0.0
        %vm842 = vcmp.ge.f32.partialorder %v810, 0.0
        %vm843 = vcmp.ge.f32.partialorder %v811, 0.0
        %vm844 = vcmp.ge.f32.partialorder %v812, 0.0
        %vm845 = vcmp.ge.f32.partialorder %v813, 0.0
        %vm846 = vcmp.ge.f32.partialorder %v814, 0.0
        %vm847 = vcmp.ge.f32.partialorder %v815, 0.0
        %vm848 = vcmp.ge.f32.partialorder %v816, 0.0
        %vm849 = vcmp.ge.f32.partialorder %v817, 0.0
        %vm850 = vcmp.ge.f32.partialorder %v818, 0.0
        %vm851 = vcmp.ge.f32.partialorder %v819, 0.0
        %vm852 = vcmp.ge.f32.partialorder %v820, 0.0
        %vm853 = vcmp.ge.f32.partialorder %v821, 0.0
        %vm854 = vcmp.ge.f32.partialorder %v822, 0.0
        %vm855 = vcmp.ge.f32.partialorder %v823, 0.0
        %vm856 = vcmp.ge.f32.partialorder %v824, 0.0
        %vm857 = vcmp.ge.f32.partialorder %v825, 0.0
        %vm858 = vcmp.ge.f32.partialorder %v826, 0.0
        %v859 = vld [vmem:[%s348] sm:$0xff]
        %v860 = vld [vmem:[%s348 + $0x8] sm:$0xff]
        %v861 = vld [vmem:[%s348 + $0x10] sm:$0xff]
        %v862 = vld [vmem:[%s348 + $0x18] sm:$0xff]
        %v863 = vld [vmem:[%s348 + $0x20] sm:$0xff]
        %v864 = vld [vmem:[%s348 + $0x28] sm:$0xff]
        %v865 = vld [vmem:[%s348 + $0x30] sm:$0xff]
        %v866 = vld [vmem:[%s348 + $0x38] sm:$0xff]
        %v867 = vld [vmem:[%s348 + $0x40] sm:$0xff]
        %v868 = vld [vmem:[%s348 + $0x48] sm:$0xff]
        %v869 = vld [vmem:[%s348 + $0x50] sm:$0xff]
        %v870 = vld [vmem:[%s348 + $0x58] sm:$0xff]
        %v871 = vld [vmem:[%s348 + $0x60] sm:$0xff]
        %v872 = vld [vmem:[%s348 + $0x68] sm:$0xff]
        %v873 = vld [vmem:[%s348 + $0x70] sm:$0xff]
        %v874 = vld [vmem:[%s348 + $0x78] sm:$0xff]
        %876 = vset.pattern.permute.xlu0 0
        %877 = vperm.xlu0 %876, %v859
        %v878 = vpop.permute.xlu0 %877
        %881 = vset.pattern.permute.xlu0 0
        %882 = vperm.xlu0 %881, %v860
        %v883 = vpop.permute.xlu0 %882
        %886 = vset.pattern.permute.xlu0 0
        %887 = vperm.xlu0 %886, %v861
        %v888 = vpop.permute.xlu0 %887
        %891 = vset.pattern.permute.xlu0 0
        %892 = vperm.xlu0 %891, %v862
        %v893 = vpop.permute.xlu0 %892
        %896 = vset.pattern.permute.xlu0 0
        %897 = vperm.xlu0 %896, %v863
        %v898 = vpop.permute.xlu0 %897
        %901 = vset.pattern.permute.xlu0 0
        %902 = vperm.xlu0 %901, %v864
        %v903 = vpop.permute.xlu0 %902
        %906 = vset.pattern.permute.xlu0 0
        %907 = vperm.xlu0 %906, %v865
        %v908 = vpop.permute.xlu0 %907
        %911 = vset.pattern.permute.xlu0 0
        %912 = vperm.xlu0 %911, %v866
        %v913 = vpop.permute.xlu0 %912
        %916 = vset.pattern.permute.xlu0 0
        %917 = vperm.xlu0 %916, %v867
        %v918 = vpop.permute.xlu0 %917
        %921 = vset.pattern.permute.xlu0 0
        %922 = vperm.xlu0 %921, %v868
        %v923 = vpop.permute.xlu0 %922
        %926 = vset.pattern.permute.xlu0 0
        %927 = vperm.xlu0 %926, %v869
        %v928 = vpop.permute.xlu0 %927
        %931 = vset.pattern.permute.xlu0 0
        %932 = vperm.xlu0 %931, %v870
        %v933 = vpop.permute.xlu0 %932
        %936 = vset.pattern.permute.xlu0 0
        %937 = vperm.xlu0 %936, %v871
        %v938 = vpop.permute.xlu0 %937
        %941 = vset.pattern.permute.xlu0 0
        %942 = vperm.xlu0 %941, %v872
        %v943 = vpop.permute.xlu0 %942
        %946 = vset.pattern.permute.xlu0 0
        %947 = vperm.xlu0 %946, %v873
        %v948 = vpop.permute.xlu0 %947
        %951 = vset.pattern.permute.xlu0 0
        %952 = vperm.xlu0 %951, %v874
        %v953 = vpop.permute.xlu0 %952
        %v955 = vmul.f32 %v795, %v878
        %v956 = vmul.f32 %v796, %v878
        %v957 = vmul.f32 %v797, %v883
        %v958 = vmul.f32 %v798, %v883
        %v959 = vmul.f32 %v799, %v888
        %v960 = vmul.f32 %v800, %v888
        %v961 = vmul.f32 %v801, %v893
        %v962 = vmul.f32 %v802, %v893
        %v963 = vmul.f32 %v803, %v898
        %v964 = vmul.f32 %v804, %v898
        %v965 = vmul.f32 %v805, %v903
        %v966 = vmul.f32 %v806, %v903
        %v967 = vmul.f32 %v807, %v908
        %v968 = vmul.f32 %v808, %v908
        %v969 = vmul.f32 %v809, %v913
        %v970 = vmul.f32 %v810, %v913
        %v971 = vmul.f32 %v811, %v918
        %v972 = vmul.f32 %v812, %v918
        %v973 = vmul.f32 %v813, %v923
        %v974 = vmul.f32 %v814, %v923
        %v975 = vmul.f32 %v815, %v928
        %v976 = vmul.f32 %v816, %v928
        %v977 = vmul.f32 %v817, %v933
        %v978 = vmul.f32 %v818, %v933
        %v979 = vmul.f32 %v819, %v938
        %v980 = vmul.f32 %v820, %v938
        %v981 = vmul.f32 %v821, %v943
        %v982 = vmul.f32 %v822, %v943
        %v983 = vmul.f32 %v823, %v948
        %v984 = vmul.f32 %v824, %v948
        %v985 = vmul.f32 %v825, %v953
        %v986 = vmul.f32 %v826, %v953
        %v987 = vsel %vm827, %v795, %v955
        %v988 = vsel %vm828, %v796, %v956
        %v989 = vsel %vm829, %v797, %v957
        %v990 = vsel %vm830, %v798, %v958
        %v991 = vsel %vm831, %v799, %v959
        %v992 = vsel %vm832, %v800, %v960
        %v993 = vsel %vm833, %v801, %v961
        %v994 = vsel %vm834, %v802, %v962
        %v995 = vsel %vm835, %v803, %v963
        %v996 = vsel %vm836, %v804, %v964
        %v997 = vsel %vm837, %v805, %v965
        %v998 = vsel %vm838, %v806, %v966
        %v999 = vsel %vm839, %v807, %v967
        %v1000 = vsel %vm840, %v808, %v968
        %v1001 = vsel %vm841, %v809, %v969
        %v1002 = vsel %vm842, %v810, %v970
        %v1003 = vsel %vm843, %v811, %v971
        %v1004 = vsel %vm844, %v812, %v972
        %v1005 = vsel %vm845, %v813, %v973
        %v1006 = vsel %vm846, %v814, %v974
        %v1007 = vsel %vm847, %v815, %v975
        %v1008 = vsel %vm848, %v816, %v976
        %v1009 = vsel %vm849, %v817, %v977
        %v1010 = vsel %vm850, %v818, %v978
        %v1011 = vsel %vm851, %v819, %v979
        %v1012 = vsel %vm852, %v820, %v980
        %v1013 = vsel %vm853, %v821, %v981
        %v1014 = vsel %vm854, %v822, %v982
        %v1015 = vsel %vm855, %v823, %v983
        %v1016 = vsel %vm856, %v824, %v984
        %v1017 = vsel %vm857, %v825, %v985
        %v1018 = vsel %vm858, %v826, %v986
        %1019 = vst [vmem:[%s315] sm:$0xff] %v987
        %1020 = vst [vmem:[%s315 + $0x8] sm:$0xff] %v988
        %1021 = vst [vmem:[%s315 + $0x10] sm:$0xff] %v989
        %1022 = vst [vmem:[%s315 + $0x18] sm:$0xff] %v990
        %1023 = vst [vmem:[%s315 + $0x20] sm:$0xff] %v991
        %1024 = vst [vmem:[%s315 + $0x28] sm:$0xff] %v992
        %1025 = vst [vmem:[%s315 + $0x30] sm:$0xff] %v993
        %1026 = vst [vmem:[%s315 + $0x38] sm:$0xff] %v994
        %1027 = vst [vmem:[%s315 + $0x40] sm:$0xff] %v995
        %1028 = vst [vmem:[%s315 + $0x48] sm:$0xff] %v996
        %1029 = vst [vmem:[%s315 + $0x50] sm:$0xff] %v997
        %1030 = vst [vmem:[%s315 + $0x58] sm:$0xff] %v998
        %1031 = vst [vmem:[%s315 + $0x60] sm:$0xff] %v999
        %1032 = vst [vmem:[%s315 + $0x68] sm:$0xff] %v1000
        %1033 = vst [vmem:[%s315 + $0x70] sm:$0xff] %v1001
        %1034 = vst [vmem:[%s315 + $0x78] sm:$0xff] %v1002
        %1035 = vst [vmem:[%s315 + $0x80] sm:$0xff] %v1003
        %1036 = vst [vmem:[%s315 + $0x88] sm:$0xff] %v1004
        %1037 = vst [vmem:[%s315 + $0x90] sm:$0xff] %v1005
        %1038 = vst [vmem:[%s315 + $0x98] sm:$0xff] %v1006
        %1039 = vst [vmem:[%s315 + $0xa0] sm:$0xff] %v1007
        %1040 = vst [vmem:[%s315 + $0xa8] sm:$0xff] %v1008
        %1041 = vst [vmem:[%s315 + $0xb0] sm:$0xff] %v1009
        %1042 = vst [vmem:[%s315 + $0xb8] sm:$0xff] %v1010
        %1043 = vst [vmem:[%s315 + $0xc0] sm:$0xff] %v1011
        %1044 = vst [vmem:[%s315 + $0xc8] sm:$0xff] %v1012
        %1045 = vst [vmem:[%s315 + $0xd0] sm:$0xff] %v1013
        %1046 = vst [vmem:[%s315 + $0xd8] sm:$0xff] %v1014
        %1047 = vst [vmem:[%s315 + $0xe0] sm:$0xff] %v1015
        %1048 = vst [vmem:[%s315 + $0xe8] sm:$0xff] %v1016
        %1049 = vst [vmem:[%s315 + $0xf0] sm:$0xff] %v1017
        %1050 = vst [vmem:[%s315 + $0xf8] sm:$0xff] %v1018
        %s1051 = sand.u32 %s182, 1
        %s1052 = scalar_lea.sflag [#allocation3], %s1051
        %s1053 = sand.u32 %s182, 1
        %s1054 = smul.addr %s1053, 256
        %s1055 = scalar_lea.vmem [#allocation2], %s1054
        // Predicated region
        $region41: #{tpu_custom_call.1} parent=39 // pred_check
          %p1056 = pneg %p192
        $region42: #{tpu_custom_call.1} parent=39 // pred_check_branch
          %1058 = sbr.rel (%p1056) target = $region44
        $region43: #{tpu_custom_call.1} parent=39 // pred_region
          %s1059 = smul.u32 16, %s25
          %s1060 = smul.u32 2, %s26
          %s1062 = ssub.s32 4096, 4096
          %1063 = vsyncadd %s1052, %s1062
          %s1064 = smul.addr %s1059, 2
          %s1065 = sadd.s32 %s1060, %s1064
          %s1066 = smul.addr %s24, 32
          %s1067 = sadd.s32 %s1065, %s1066
          %s1068 = smul.addr %s1067, 128
          %s1069 = scalar_lea.hbm %s5, %s1068
          %s1070 = sshll.u32 %s1055, 4
          %s1071 = int_to_ptr.vmem [resolvable:$true] %s1070
          %1076 = dma.vmem_to_hbm [thread:$0]  %s1071, 4096, %s1069, %s1052, 256, 256, 16
        $region44: #{tpu_custom_call.1} parent=39 // pred_fallthru
          _
      $region40: #{tpu_custom_call.1} parent=5 // pred_fallthru
        _
      %p1077 = scmp.le.s32.totalorder 2, %s14
      // Predicated region
      $region45: #{tpu_custom_call.1} parent=5 // pred_check
        %p1078 = pneg %p1077
      $region46: #{tpu_custom_call.1} parent=5 // pred_check_branch
        %1080 = sbr.rel (%p1078) target = $region48
      $region47: #{tpu_custom_call.1} parent=5 // pred_region
        %s1081 = ssub.s32 %s14, 2
        // Predicated region
        $region49: #{tpu_custom_call.1} parent=47 // pred_check
          %p1082 = pneg %p198
        $region50: #{tpu_custom_call.1} parent=47 // pred_check_branch
          %1084 = sbr.rel (%p1082) target = $region52
        $region51: #{tpu_custom_call.1} parent=47 // pred_region
          %s1085 = sand.u32 %s183, 1
          %s1086 = scalar_lea.sflag [#allocation3], %s1085
          %s1087 = sand.u32 %s183, 1
          %s1088 = smul.addr %s1087, 256
          %s1089 = scalar_lea.vmem [#allocation2], %s1088
          %1090 = dma.done %s1086, 4096
        $region52: #{tpu_custom_call.1} parent=47 // pred_fallthru
          _
      $region48: #{tpu_custom_call.1} parent=5 // pred_fallthru
        _
    $region6: #{tpu_custom_call.1} parent=1 // loop_footer
      %s18 = sadd.s32 1, %s14
    $region7: #{tpu_custom_call.1} parent=1 // loop_footer_branch
      %13 = sbr.rel target = $region3
    $region8: #{tpu_custom_call.1} parent=1 // loop_exit
      _
    %1091 = vsyncpa [#allocation3], 1
    %s1092 = scalar_lea.sflag [#allocation3], 1
    %1093 = vsyncpa %s1092, 1

</llo_original>
